<compile_context>
chip_gen: v7x
topology: tpu7x:2x2x1
jax: 0.10.0
libtpu: 0.0.40
codegen_flags: <defaults>
</compile_context>

<pallas_src>
import math

import jax
import jax.numpy as jnp
from jax import lax
from jax.experimental import pallas as pl
from jax.experimental.pallas import tpu as pltpu


def _round_up(x, m):
    return ((x + m - 1) // m) * m


def pa_head_kernel(p_ref, w1_ref, shift_ref, w2_ref, b2_ref, o_ref):
    """One grid step = TM rows of the flattened (N*H*W) spatial axis.

    p_ref     : (TM, K)   im2col patches, K = 9*Cin, compute dtype
    w1_ref    : (K, Hp)   conv1 weights with BN scale folded in, compute dtype
    shift_ref : (1, Hp)   folded BN shift (+ conv1 bias), f32
    w2_ref    : (Hp, Cp)  1x1 conv weights, zero padded, compute dtype
    b2_ref    : (1, Cp)   conv2 bias, zero padded, f32
    o_ref     : (TM, Cp)  output rows, f32, lane dense (Cp multiple of 128)
    """
    # conv3x3 (+ folded BN scale) as a single MXU matmul, f32 accumulation.
    acc = jnp.dot(p_ref[...], w1_ref[...], preferred_element_type=jnp.float32)
    # Folded BN shift (+ conv1 bias), ReLU on the VPU.
    h = jnp.maximum(acc + shift_ref[...], 0.0)
    # 1x1 conv == matmul over channels, plus bias.
    out = jnp.dot(h.astype(w2_ref.dtype), w2_ref[...],
                  preferred_element_type=jnp.float32) + b2_ref[...]
    o_ref[...] = out.astype(o_ref.dtype)


def pa_head_forward(x_nchw, params, *, compute_dtype=jnp.bfloat16, tile_m=256):
    """x_nchw: (N, Cin, H, W) float32 -> (N, num_classes, H, W) float32."""
    w1 = params["w1"]          # (3, 3, Cin, hidden)  HWIO
    b1 = params["b1"]          # (hidden,)
    gamma = params["gamma"]
    beta = params["beta"]
    run_mean = params["running_mean"]
    run_var = params["running_var"]
    eps = params["eps"]
    w2 = params["w2"]          # (hidden, num_classes)
    b2 = params["b2"]          # (num_classes,)

    N, Cin, H, W = x_nchw.shape
    hidden = w1.shape[3]
    num_classes = w2.shape[1]

    # Fold BN (eval mode): bn(conv1(x)) = conv1(x)*scale + shift. Fold scale
    # into w1 so only the shift-add remains in-kernel.
    scale = gamma / jnp.sqrt(run_var + eps)                 # (hidden,)
    shift = (b1 - run_mean) * scale + beta                  # (hidden,)

    K = 9 * Cin
    Hp = _round_up(hidden, 128)        # lane-dense intermediate width
    Cp = _round_up(num_classes, 128)   # lane-dense output width

    # ---- im2col in the wrapper: (N*H*W, 9*Cin) with K on the lane axis.
    x_nhwc = jnp.transpose(x_nchw, (0, 2, 3, 1))
    x_pad = jnp.pad(x_nhwc, ((0, 0), (1, 1), (1, 1), (0, 0)))
    patches = jnp.concatenate(
        [x_pad[:, kh:kh + H, kw:kw + W, :] for kh in range(3) for kw in range(3)],
        axis=-1,
    ).reshape(N * H * W, K)

    M = N * H * W
    TM = tile_m if M >= tile_m else _round_up(M, 8)
    M_pad = _round_up(M, TM)
    if M_pad != M:
        patches = jnp.pad(patches, ((0, M_pad - M), (0, 0)))
    patches = patches.astype(compute_dtype)

    # ---- weights: BN folded, zero padded to lane-dense widths, bf16 for MXU.
    w1f = (w1 * scale[None, None, None, :]).reshape(K, hidden)
    w1f = jnp.pad(w1f, ((0, 0), (0, Hp - hidden))).astype(compute_dtype)
    shift_p = jnp.pad(shift, (0, Hp - hidden)).reshape(1, Hp).astype(jnp.float32)
    w2p = jnp.pad(w2, ((0, Hp - hidden), (0, Cp - num_classes))).astype(compute_dtype)
    b2p = jnp.pad(b2, (0, Cp - num_classes)).reshape(1, Cp).astype(jnp.float32)

    grid = (M_pad // TM,)
    itemsize = jnp.dtype(compute_dtype).itemsize
    cost = pl.CostEstimate(
        flops=2 * M_pad * Hp * (K + Cp),
        transcendentals=0,
        bytes_accessed=(M_pad * K + K * Hp + Hp * Cp) * itemsize
        + (Hp + Cp) * 4 + M_pad * Cp * 4,
    )

    out = pl.pallas_call(
        pa_head_kernel,
        out_shape=jax.ShapeDtypeStruct((M_pad, Cp), jnp.float32),
        grid_spec=pltpu.PrefetchScalarGridSpec(
            num_scalar_prefetch=0,
            grid=grid,
            in_specs=[
                pl.BlockSpec((TM, K), lambda i: (i, 0)),
                pl.BlockSpec((K, Hp), lambda i: (0, 0)),
                pl.BlockSpec((1, Hp), lambda i: (0, 0)),
                pl.BlockSpec((Hp, Cp), lambda i: (0, 0)),
                pl.BlockSpec((1, Cp), lambda i: (0, 0)),
            ],
            out_specs=pl.BlockSpec((TM, Cp), lambda i: (i, 0)),
        ),
        compiler_params=pltpu.CompilerParams(
            dimension_semantics=("parallel",),
        ),
        cost_estimate=cost,
    )(patches, w1f, shift_p, w2p, b2p)

    # Drop padded rows / classes, restore NCHW to match the PyTorch module.
    out = out[:M, :num_classes].reshape(N, H, W, num_classes)
    return jnp.transpose(out, (0, 3, 1, 2))


def init_params(key, in_channels, hidden_dim, num_classes):
    """Deterministic parameter init mirroring PA_Head.__init__."""
    k1, k2, k3, k4 = jax.random.split(key, 4)
    std1 = math.sqrt(2.0 / (3 * 3 * hidden_dim))
    w1 = std1 * jax.random.normal(k1, (3, 3, in_channels, hidden_dim), jnp.float32)
    b1 = 0.01 * jax.random.normal(k2, (hidden_dim,), jnp.float32)
    std2 = math.sqrt(2.0 / (1 * 1 * num_classes))
    w2 = std2 * jax.random.normal(k3, (hidden_dim, num_classes), jnp.float32)
    b2 = 0.01 * jax.random.normal(k4, (num_classes,), jnp.float32)
    return dict(
        w1=w1, b1=b1,
        gamma=jnp.ones((hidden_dim,), jnp.float32),
        beta=jnp.zeros((hidden_dim,), jnp.float32),
        running_mean=jnp.zeros((hidden_dim,), jnp.float32),
        running_var=jnp.ones((hidden_dim,), jnp.float32),
        eps=jnp.float32(1e-5),
        w2=w2, b2=b2,
    )


def pa_head_reference(x_nchw, params):
    """Plain-JAX reference (lax conv) for correctness checking."""
    scale = params["gamma"] / jnp.sqrt(params["running_var"] + params["eps"])
    shift = (params["b1"] - params["running_mean"]) * scale + params["beta"]
    out = lax.conv_general_dilated(
        x_nchw, params["w1"], window_strides=(1, 1), padding=((1, 1), (1, 1)),
        dimension_numbers=("NCHW", "HWIO", "NCHW"),
    )
    out = out * scale[None, :, None, None] + shift[None, :, None, None]
    out = jnp.maximum(out, 0.0)
    w2 = params["w2"][None, None, :, :]  # (1,1,hidden,num_classes) HWIO
    out = lax.conv_general_dilated(
        out, w2, window_strides=(1, 1), padding="VALID",
        dimension_numbers=("NCHW", "HWIO", "NCHW"),
    )
    return out + params["b2"][None, :, None, None]


if __name__ == "__main__":
    # Small shapes consistent with PA_Head: num_classes = 2 kernels + 4 emb dims.
    N, Cin, H, W = 2, 4, 16, 16
    hidden_dim, num_classes = 32, 6

    key = jax.random.PRNGKey(0)
    kx, kp = jax.random.split(key)
    x = jax.random.normal(kx, (N, Cin, H, W), jnp.float32)
    params = init_params(kp, Cin, hidden_dim, num_classes)

    ref = pa_head_reference(x, params)

    # f32 compute path: tight tolerance against the lax-conv reference.
    out_f32 = jax.block_until_ready(
        pa_head_forward(x, params, compute_dtype=jnp.float32))
    assert out_f32.shape == (N, num_classes, H, W), out_f32.shape
    assert jnp.allclose(out_f32, ref, atol=1e-4, rtol=1e-4), (
        float(jnp.max(jnp.abs(out_f32 - ref)))
    )

    # Default bf16 MXU path (f32 accumulation): tolerance reflects bf16 inputs.
    out_bf16 = jax.block_until_ready(pa_head_forward(x, params))
    assert out_bf16.shape == (N, num_classes, H, W), out_bf16.shape
    assert jnp.allclose(out_bf16, ref, atol=5e-2, rtol=5e-2), (
        float(jnp.max(jnp.abs(out_bf16 - ref)))
    )

    print("KERNEL_OK")
</pallas_src>

<mosaic_0001>
module attributes {stable_mosaic.version = 11 : i64} {
  func.func @pa_head_kernel(%arg0: i32, %arg1: memref<256x36xf32, #tpu.memory_space<vmem>>, %arg2: memref<36x128xf32, #tpu.memory_space<vmem>>, %arg3: memref<1x128xf32, #tpu.memory_space<vmem>>, %arg4: memref<128x128xf32, #tpu.memory_space<vmem>>, %arg5: memref<1x128xf32, #tpu.memory_space<vmem>>, %arg6: memref<256x128xf32, #tpu.memory_space<vmem>>) attributes {dimension_semantics = [#tpu.dimension_semantics<parallel>], iteration_bounds = array<i64: 2>, scalar_prefetch = 0 : i64, scratch_operands = 0 : i64, tpu.core_type = #tpu.core_type<tc>, window_params = [{transform_indices = @transform_0, window_bounds = array<i64: 256, 36>}, {pipeline_mode = #tpu.pipeline_mode<synchronous>, transform_indices = @transform_1, window_bounds = array<i64: 36, 128>}, {pipeline_mode = #tpu.pipeline_mode<synchronous>, transform_indices = @transform_2, window_bounds = array<i64: 1, 128>}, {pipeline_mode = #tpu.pipeline_mode<synchronous>, transform_indices = @transform_3, window_bounds = array<i64: 128, 128>}, {pipeline_mode = #tpu.pipeline_mode<synchronous>, transform_indices = @transform_4, window_bounds = array<i64: 1, 128>}, {transform_indices = @transform_5, window_bounds = array<i64: 256, 128>}]} {
    %c0 = arith.constant 0 : index
    %c0_0 = arith.constant 0 : index
    %0 = vector.load %arg1[%c0, %c0_0] : memref<256x36xf32, #tpu.memory_space<vmem>>, vector<256x36xf32>
    %c0_1 = arith.constant 0 : index
    %c0_2 = arith.constant 0 : index
    %1 = vector.load %arg2[%c0_1, %c0_2] : memref<36x128xf32, #tpu.memory_space<vmem>>, vector<36x128xf32>
    %cst = arith.constant dense<0.000000e+00> : vector<256x128xf32>
    %2 = tpu.matmul %0, %1, %cst {dimension_numbers = #tpu.dot_dimension_numbers<[1], [0], [0], [1], [0, 0, 1, 1], [], []>} : vector<256x36xf32>, vector<36x128xf32>, vector<256x128xf32> -> vector<256x128xf32>
    %c0_3 = arith.constant 0 : index
    %c0_4 = arith.constant 0 : index
    %3 = vector.load %arg3[%c0_3, %c0_4] : memref<1x128xf32, #tpu.memory_space<vmem>>, vector<1x128xf32>
    %4 = vector.broadcast %3 : vector<1x128xf32> to vector<256x128xf32>
    %5 = arith.addf %2, %4 : vector<256x128xf32>
    %cst_5 = arith.constant 0.000000e+00 : f32
    %6 = vector.broadcast %cst_5 : f32 to vector<256x128xf32>
    %7 = arith.maximumf %5, %6 : vector<256x128xf32>
    %c0_6 = arith.constant 0 : index
    %c0_7 = arith.constant 0 : index
    %8 = vector.load %arg4[%c0_6, %c0_7] : memref<128x128xf32, #tpu.memory_space<vmem>>, vector<128x128xf32>
    %cst_8 = arith.constant dense<0.000000e+00> : vector<256x128xf32>
    %9 = tpu.matmul %7, %8, %cst_8 {dimension_numbers = #tpu.dot_dimension_numbers<[1], [0], [0], [1], [0, 0, 1, 1], [], []>} : vector<256x128xf32>, vector<128x128xf32>, vector<256x128xf32> -> vector<256x128xf32>
    %c0_9 = arith.constant 0 : index
    %c0_10 = arith.constant 0 : index
    %10 = vector.load %arg5[%c0_9, %c0_10] : memref<1x128xf32, #tpu.memory_space<vmem>>, vector<1x128xf32>
    %11 = vector.broadcast %10 : vector<1x128xf32> to vector<256x128xf32>
    %12 = arith.addf %9, %11 : vector<256x128xf32>
    %c0_11 = arith.constant 0 : index
    %c0_12 = arith.constant 0 : index
    %13 = vector.load %arg6[%c0_11, %c0_12] : memref<256x128xf32, #tpu.memory_space<vmem>>, vector<256x128xf32>
    tpu.vector_store %arg6[%c0_11, %c0_12], %12 {strides = array<i32>} : memref<256x128xf32, #tpu.memory_space<vmem>>, vector<256x128xf32>,
    return
  }
  func.func @transform_0(%arg0: i32) -> (i32, i32) {
    %c0_i32 = arith.constant 0 : i32
    %c0_i32_0 = arith.constant 0 : i32
    return %arg0, %c0_i32 : i32, i32
  }
  func.func @transform_1(%arg0: i32) -> (i32, i32) {
    %c0_i32 = arith.constant 0 : i32
    %c0_i32_0 = arith.constant 0 : i32
    %c0_i32_1 = arith.constant 0 : i32
    return %c0_i32, %c0_i32_0 : i32, i32
  }
  func.func @transform_2(%arg0: i32) -> (i32, i32) {
    %c0_i32 = arith.constant 0 : i32
    %c0_i32_0 = arith.constant 0 : i32
    %c0_i32_1 = arith.constant 0 : i32
    return %c0_i32, %c0_i32_0 : i32, i32
  }
  func.func @transform_3(%arg0: i32) -> (i32, i32) {
    %c0_i32 = arith.constant 0 : i32
    %c0_i32_0 = arith.constant 0 : i32
    %c0_i32_1 = arith.constant 0 : i32
    return %c0_i32, %c0_i32_0 : i32, i32
  }
  func.func @transform_4(%arg0: i32) -> (i32, i32) {
    %c0_i32 = arith.constant 0 : i32
    %c0_i32_0 = arith.constant 0 : i32
    %c0_i32_1 = arith.constant 0 : i32
    return %c0_i32, %c0_i32_0 : i32, i32
  }
  func.func @transform_5(%arg0: i32) -> (i32, i32) {
    %c0_i32 = arith.constant 0 : i32
    %c0_i32_0 = arith.constant 0 : i32
    return %arg0, %c0_i32 : i32, i32
  }
}

</mosaic_0001>

<llo_original>
// kernel: tpu_custom_call.1
$region0: #{tpu_custom_call.1}
  #allocation0 [shape = 'u32[]', space=smem, size = 0x4, offset = 0x4, fixed_abs, tag = 'smem constant byte address 0x4 - core index']
  #allocation1 [shape = 'u32[144,128]{1,0:T(1,128)}', space=vmem, size = 0x12000, scoped, tag = 'internal scratch']
  %s0 = inlined_call_operand.vmem [shape: f32[512,36], index: 0, kind: input, shape index: {}]
  %s1 = inlined_call_operand.vmem [shape: f32[36,128], index: 1, kind: input, shape index: {}]
  %s2 = inlined_call_operand.vmem [shape: f32[1,128], index: 2, kind: input, shape index: {}]
  %s3 = inlined_call_operand.vmem [shape: f32[128,128], index: 3, kind: input, shape index: {}]
  %s4 = inlined_call_operand.vmem [shape: f32[1,128], index: 4, kind: input, shape index: {}]
  %s5 = inlined_call_operand.hbm [shape: f32[512,128], index: 5, kind: output, shape index: {}]
  %s6 = sld [smem:[#allocation0]]
  $region53: #{tpu_custom_call.1} parent=0
    _
  %s8 = ssub.s32 1, %s6
  %s9 = scalar_select 0, %s8, %s6
  $region1: #{tpu_custom_call.1} parent=0
    #allocation2 [shape = 'u8[262144]{0}', space=vmem, size = 0x40000, scoped, tag = 'output window, operand 0']
    #allocation3 [shape = 's32[2]{0}', space=sflag, size = 0x8, scoped, tag = 'scoped memory for tpu_custom_call.1']
    %10 = vsyncpa [#allocation3], 0
    %s11 = scalar_lea.sflag [#allocation3], 1
    %12 = vsyncpa %s11, 0
    loop: start=0, step=1, limit=4
    $region2: #{tpu_custom_call.1} parent=1 // loop_pre_header
      _
    $region3: #{tpu_custom_call.1} parent=1 // loop_header
      %s14 = sphi 0, %s18
      %p15 = scmp.ge.s32.totalorder %s14, 4
      %s24 = sphi 0, %s26
      %s27 = sphi 0, %s24
      %s28 = sphi 0, %s27
      %s44 = sphi 0, %s28
      %s48 = sphi 0, %s48
      %s50 = sphi 0, %s48
      %s51 = sphi 0, %s50
      %s65 = sphi 0, %s51
      %s69 = sphi 0, %s69
      %s71 = sphi 0, %s69
      %s72 = sphi 0, %s71
      %s86 = sphi 0, %s72
      %s90 = sphi 0, %s90
      %s92 = sphi 0, %s90
      %s93 = sphi 0, %s92
      %s107 = sphi 0, %s93
      %s111 = sphi 0, %s111
      %s113 = sphi 0, %s111
      %s114 = sphi 0, %s113
      %s128 = sphi 0, %s114
      %s134 = sphi 0, %s136
      %s137 = sphi 0, %s134
      %s138 = sphi 0, %s137
      %s154 = sphi 0, %s138
    $region4: #{tpu_custom_call.1} parent=1 // loop_header_branch
      %17 = sbr.rel (%p15) target = $region8
    $region5: #{tpu_custom_call.1} parent=1 // loop_body
      %s19 = ssub.s32 %s14, 1
      %s20 = ssub.s32 %s14, 2
      %s21 = sadd.s32 %s14, 1
      %s22 = ssub.s32 %s14, %s21
      %p23 = scmp.eq.s32.totalorder %s22, 0
      %s25 = sadd.s32 %s24, 1
      %s26 = scalar_select %p23, %s24, %s25
      %p29 = pneg %p23
      %p30 = scmp.eq.s32.totalorder %s14, 1
      %p31 = por %p29, %p30
      %p32 = scmp.ne.s32.totalorder %s24, %s27
      %p33 = scmp.eq.s32.totalorder %s14, 0
      %p34 = por %p32, %p33
      %p35 = scmp.ne.s32.totalorder %s24, %s27
      %p36 = scmp.eq.s32.totalorder %s19, 1
      %p37 = por %p35, %p36
      %p38 = scmp.ne.s32.totalorder %s27, %s28
      %p39 = scmp.eq.s32.totalorder %s19, 0
      %p40 = por %p38, %p39
      %p41 = scmp.ne.s32.totalorder %s27, %s28
      %p42 = scmp.eq.s32.totalorder %s20, 1
      %p43 = por %p41, %p42
      %p45 = scmp.ne.s32.totalorder %s28, %s44
      %p46 = scmp.eq.s32.totalorder %s20, 0
      %p47 = por %p45, %p46
      %s49 = sadd.s32 %s48, 1
      %p52 = scmp.eq.s32.totalorder %s14, 1
      %p53 = scmp.ne.s32.totalorder %s48, %s50
      %p54 = scmp.eq.s32.totalorder %s14, 0
      %p55 = por %p53, %p54
      %p56 = scmp.ne.s32.totalorder %s48, %s50
      %p57 = scmp.eq.s32.totalorder %s19, 1
      %p58 = por %p56, %p57
      %p59 = scmp.ne.s32.totalorder %s50, %s51
      %p60 = scmp.eq.s32.totalorder %s19, 0
      %p61 = por %p59, %p60
      %p62 = scmp.ne.s32.totalorder %s50, %s51
      %p63 = scmp.eq.s32.totalorder %s20, 1
      %p64 = por %p62, %p63
      %p66 = scmp.ne.s32.totalorder %s51, %s65
      %p67 = scmp.eq.s32.totalorder %s20, 0
      %p68 = por %p66, %p67
      %s70 = sadd.s32 %s69, 1
      %p73 = scmp.eq.s32.totalorder %s14, 1
      %p74 = scmp.ne.s32.totalorder %s69, %s71
      %p75 = scmp.eq.s32.totalorder %s14, 0
      %p76 = por %p74, %p75
      %p77 = scmp.ne.s32.totalorder %s69, %s71
      %p78 = scmp.eq.s32.totalorder %s19, 1
      %p79 = por %p77, %p78
      %p80 = scmp.ne.s32.totalorder %s71, %s72
      %p81 = scmp.eq.s32.totalorder %s19, 0
      %p82 = por %p80, %p81
      %p83 = scmp.ne.s32.totalorder %s71, %s72
      %p84 = scmp.eq.s32.totalorder %s20, 1
      %p85 = por %p83, %p84
      %p87 = scmp.ne.s32.totalorder %s72, %s86
      %p88 = scmp.eq.s32.totalorder %s20, 0
      %p89 = por %p87, %p88
      %s91 = sadd.s32 %s90, 1
      %p94 = scmp.eq.s32.totalorder %s14, 1
      %p95 = scmp.ne.s32.totalorder %s90, %s92
      %p96 = scmp.eq.s32.totalorder %s14, 0
      %p97 = por %p95, %p96
      %p98 = scmp.ne.s32.totalorder %s90, %s92
      %p99 = scmp.eq.s32.totalorder %s19, 1
      %p100 = por %p98, %p99
      %p101 = scmp.ne.s32.totalorder %s92, %s93
      %p102 = scmp.eq.s32.totalorder %s19, 0
      %p103 = por %p101, %p102
      %p104 = scmp.ne.s32.totalorder %s92, %s93
      %p105 = scmp.eq.s32.totalorder %s20, 1
      %p106 = por %p104, %p105
      %p108 = scmp.ne.s32.totalorder %s93, %s107
      %p109 = scmp.eq.s32.totalorder %s20, 0
      %p110 = por %p108, %p109
      %s112 = sadd.s32 %s111, 1
      %p115 = scmp.eq.s32.totalorder %s14, 1
      %p116 = scmp.ne.s32.totalorder %s111, %s113
      %p117 = scmp.eq.s32.totalorder %s14, 0
      %p118 = por %p116, %p117
      %p119 = scmp.ne.s32.totalorder %s111, %s113
      %p120 = scmp.eq.s32.totalorder %s19, 1
      %p121 = por %p119, %p120
      %p122 = scmp.ne.s32.totalorder %s113, %s114
      %p123 = scmp.eq.s32.totalorder %s19, 0
      %p124 = por %p122, %p123
      %p125 = scmp.ne.s32.totalorder %s113, %s114
      %p126 = scmp.eq.s32.totalorder %s20, 1
      %p127 = por %p125, %p126
      %p129 = scmp.ne.s32.totalorder %s114, %s128
      %p130 = scmp.eq.s32.totalorder %s20, 0
      %p131 = por %p129, %p130
      %s132 = ssub.s32 %s14, %s21
      %p133 = scmp.eq.s32.totalorder %s132, 0
      %s135 = sadd.s32 %s134, 1
      %s136 = scalar_select %p133, %s134, %s135
      %p139 = pneg %p133
      %p140 = scmp.eq.s32.totalorder %s14, 1
      %p141 = por %p139, %p140
      %p142 = scmp.ne.s32.totalorder %s134, %s137
      %p143 = scmp.eq.s32.totalorder %s14, 0
      %p144 = por %p142, %p143
      %p145 = scmp.ne.s32.totalorder %s134, %s137
      %p146 = scmp.eq.s32.totalorder %s19, 1
      %p147 = por %p145, %p146
      %p148 = scmp.ne.s32.totalorder %s137, %s138
      %p149 = scmp.eq.s32.totalorder %s19, 0
      %p150 = por %p148, %p149
      %p151 = scmp.ne.s32.totalorder %s137, %s138
      %p152 = scmp.eq.s32.totalorder %s20, 1
      %p153 = por %p151, %p152
      %p155 = scmp.ne.s32.totalorder %s138, %s154
      %p156 = scmp.eq.s32.totalorder %s20, 0
      %p157 = por %p155, %p156
      %p158 = scmp.le.s32.totalorder 1, %s14
      %p159 = scmp.lt.s32.totalorder %s14, 3
      %p160 = pnand %p158, %p159
      %p161 = pneg %p160
      // Predicated region
      $region9: #{tpu_custom_call.1} parent=5 // pred_check
        _
      $region10: #{tpu_custom_call.1} parent=5 // pred_check_branch
        %163 = sbr.rel (%p160) target = $region12
      $region11: #{tpu_custom_call.1} parent=5 // pred_region
        %s164 = ssub.s32 %s14, 1
        // Predicated region
        $region13: #{tpu_custom_call.1} parent=11 // pred_check
          %p165 = pneg %p61
        $region14: #{tpu_custom_call.1} parent=11 // pred_check_branch
          %167 = sbr.rel (%p165) target = $region16
        $region15: #{tpu_custom_call.1} parent=11 // pred_region
          _
        $region16: #{tpu_custom_call.1} parent=11 // pred_fallthru
          _
        // Predicated region
        $region17: #{tpu_custom_call.1} parent=11 // pred_check
          %p168 = pneg %p82
        $region18: #{tpu_custom_call.1} parent=11 // pred_check_branch
          %170 = sbr.rel (%p168) target = $region20
        $region19: #{tpu_custom_call.1} parent=11 // pred_region
          _
        $region20: #{tpu_custom_call.1} parent=11 // pred_fallthru
          _
        // Predicated region
        $region21: #{tpu_custom_call.1} parent=11 // pred_check
          %p171 = pneg %p103
        $region22: #{tpu_custom_call.1} parent=11 // pred_check_branch
          %173 = sbr.rel (%p171) target = $region24
        $region23: #{tpu_custom_call.1} parent=11 // pred_region
          _
        $region24: #{tpu_custom_call.1} parent=11 // pred_fallthru
          _
        // Predicated region
        $region25: #{tpu_custom_call.1} parent=11 // pred_check
          %p174 = pneg %p124
        $region26: #{tpu_custom_call.1} parent=11 // pred_check_branch
          %176 = sbr.rel (%p174) target = $region28
        $region27: #{tpu_custom_call.1} parent=11 // pred_region
          _
        $region28: #{tpu_custom_call.1} parent=11 // pred_fallthru
          _
      $region12: #{tpu_custom_call.1} parent=5 // pred_fallthru
        _
      %p177 = scmp.lt.s32.totalorder %s14, 2
      // Predicated region
      $region29: #{tpu_custom_call.1} parent=5 // pred_check
        %p178 = pneg %p177
      $region30: #{tpu_custom_call.1} parent=5 // pred_check_branch
        %180 = sbr.rel (%p178) target = $region32
      $region31: #{tpu_custom_call.1} parent=5 // pred_region
        // Predicated region
        $region33: #{tpu_custom_call.1} parent=31 // pred_check
          %p181 = pneg %p34
        $region34: #{tpu_custom_call.1} parent=31 // pred_check_branch
          %183 = sbr.rel (%p181) target = $region36
        $region35: #{tpu_custom_call.1} parent=31 // pred_region
          %s184 = smul.u32 32, %s14
          %p185 = scmp.lt.s32.totalorder %s184, 63
          %s186 = scalar_select %p185, %s184, 63
          %s187 = smul.addr %s186, 8
          %s188 = scalar_lea.vmem %s0, %s187
          %s189 = smul.u32 32, %s14
        $region36: #{tpu_custom_call.1} parent=31 // pred_fallthru
          _
      $region32: #{tpu_custom_call.1} parent=5 // pred_fallthru
        _
      %p190 = scmp.le.s32.totalorder 1, %s14
      %p191 = scmp.lt.s32.totalorder %s14, 3
      %p192 = pnand %p190, %p191
      %p193 = pneg %p192
      // Predicated region
      $region37: #{tpu_custom_call.1} parent=5 // pred_check
        _
      $region38: #{tpu_custom_call.1} parent=5 // pred_check_branch
        %195 = sbr.rel (%p192) target = $region40
      $region39: #{tpu_custom_call.1} parent=5 // pred_region
        %s196 = ssub.s32 %s14, 1
        %s197 = smul.u32 32, %s19
        %p198 = scmp.lt.s32.totalorder %s197, 63
        %s199 = scalar_select %p198, %s197, 63
        %s200 = smul.addr %s199, 8
        %s201 = scalar_lea.vmem %s0, %s200
        %p202 = pneg %p40
        %p203 = pneg %p37
        %p204 = pneg %p61
        %p205 = pneg %p58
        %p206 = pneg %p82
        %p207 = pneg %p79
        %p208 = pneg %p103
        %p209 = pneg %p100
        %p210 = pneg %p124
        %p211 = pneg %p121
        %p212 = pneg %p150
        %p213 = pneg %p147
        %s214 = sand.u32 %s137, 1
        %s215 = scalar_lea.sflag [#allocation3], %s214
        %s216 = sand.u32 %s137, 1
        %s217 = smul.addr %s216, 256
        %s218 = scalar_lea.vmem [#allocation2], %s217
        %s219 = smul.u32 32, %s19
        %p220 = scmp.lt.s32.totalorder %s219, 63
        %s221 = scalar_select %p220, %s219, 63
        %s222 = smul.addr %s221, 8
        %s223 = scalar_lea.vmem %s0, %s222
        %s224 = smul.u32 32, %s19
        %s225 = smul.u32 32, %s19
        %v226 = vld [vmem:[%s223] sm:$0xff]
        %v227 = vld [vmem:[%s223 + $0x8] sm:$0xff]
        %v228 = vld [vmem:[%s223 + $0x10] sm:$0xff]
        %v229 = vld [vmem:[%s223 + $0x18] sm:$0xff]
        %v230 = vld [vmem:[%s223 + $0x20] sm:$0xff]
        %v231 = vld [vmem:[%s223 + $0x28] sm:$0xff]
        %v232 = vld [vmem:[%s223 + $0x30] sm:$0xff]
        %v233 = vld [vmem:[%s223 + $0x38] sm:$0xff]
        %v234 = vld [vmem:[%s223 + $0x40] sm:$0xff]
        %v235 = vld [vmem:[%s223 + $0x48] sm:$0xff]
        %v236 = vld [vmem:[%s223 + $0x50] sm:$0xff]
        %v237 = vld [vmem:[%s223 + $0x58] sm:$0xff]
        %v238 = vld [vmem:[%s223 + $0x60] sm:$0xff]
        %v239 = vld [vmem:[%s223 + $0x68] sm:$0xff]
        %v240 = vld [vmem:[%s223 + $0x70] sm:$0xff]
        %v241 = vld [vmem:[%s223 + $0x78] sm:$0xff]
        %v242 = vld [vmem:[%s223 + $0x80] sm:$0xff]
        %v243 = vld [vmem:[%s223 + $0x88] sm:$0xff]
        %v244 = vld [vmem:[%s223 + $0x90] sm:$0xff]
        %v245 = vld [vmem:[%s223 + $0x98] sm:$0xff]
        %v246 = vld [vmem:[%s223 + $0xa0] sm:$0xff]
        %v247 = vld [vmem:[%s223 + $0xa8] sm:$0xff]
        %v248 = vld [vmem:[%s223 + $0xb0] sm:$0xff]
        %v249 = vld [vmem:[%s223 + $0xb8] sm:$0xff]
        %v250 = vld [vmem:[%s223 + $0xc0] sm:$0xff]
        %v251 = vld [vmem:[%s223 + $0xc8] sm:$0xff]
        %v252 = vld [vmem:[%s223 + $0xd0] sm:$0xff]
        %v253 = vld [vmem:[%s223 + $0xd8] sm:$0xff]
        %v254 = vld [vmem:[%s223 + $0xe0] sm:$0xff]
        %v255 = vld [vmem:[%s223 + $0xe8] sm:$0xff]
        %v256 = vld [vmem:[%s223 + $0xf0] sm:$0xff]
        %v257 = vld [vmem:[%s223 + $0xf8] sm:$0xff]
        %v258 = vld [vmem:[%s1] sm:$0xff]
        %v259 = vld [vmem:[%s1 + $0x8] sm:$0xff]
        %v260 = vld [vmem:[%s1 + $0x10] sm:$0xff]
        %v261 = vld [vmem:[%s1 + $0x18] sm:$0xff]
        %v262 = vld [vmem:[%s1 + $0x20] sm:$0xf]
        %v263 = vld [vmem:[%s2] sm:$0x1]
        %v265 = vlaneseq
        %v266 = vshrl.u32 %v265, 7
        %v267 = vsub.s32 0, %v266
        %v268 = vrot.slane %v263, %v267
        %vm270 = vcmask 293888
        %v272 = vsel %vm270, %v226, 0
        %v275 = vsel %vm270, %v227, 0
        %v278 = vsel %vm270, %v228, 0
        %v281 = vsel %vm270, %v229, 0
        %v284 = vsel %vm270, %v230, 0
        %v287 = vsel %vm270, %v231, 0
        %v290 = vsel %vm270, %v232, 0
        %v293 = vsel %vm270, %v233, 0
        %v296 = vsel %vm270, %v234, 0
        %v299 = vsel %vm270, %v235, 0
        %v302 = vsel %vm270, %v236, 0
        %v305 = vsel %vm270, %v237, 0
        %v308 = vsel %vm270, %v238, 0
        %v311 = vsel %vm270, %v239, 0
        %v314 = vsel %vm270, %v240, 0
        %v317 = vsel %vm270, %v241, 0
        %v320 = vsel %vm270, %v242, 0
        %v323 = vsel %vm270, %v243, 0
        %v326 = vsel %vm270, %v244, 0
        %v329 = vsel %vm270, %v245, 0
        %v332 = vsel %vm270, %v246, 0
        %v335 = vsel %vm270, %v247, 0
        %v338 = vsel %vm270, %v248, 0
        %v341 = vsel %vm270, %v249, 0
        %v344 = vsel %vm270, %v250, 0
        %v347 = vsel %vm270, %v251, 0
        %v350 = vsel %vm270, %v252, 0
        %v353 = vsel %vm270, %v253, 0
        %v356 = vsel %vm270, %v254, 0
        %v359 = vsel %vm270, %v255, 0
        %v362 = vsel %vm270, %v256, 0
        %v365 = vsel %vm270, %v257, 0
        %vm367 = vcmask 1043456
        %v369 = vsel %vm367, %v262, 0
        %371 = vmatprep.subr.mxu0 0.0
        %372 = vmatpush1.msra.mxu0 %v258
        %373 = vmatprep.subr.mxu0 0.0
        %374 = vmatpush1.msra.mxu0 %v259
        %375 = vmatprep.subr.mxu0 0.0
        %376 = vmatpush1.msra.mxu0 %v260
        %377 = vmatprep.subr.mxu0 0.0
        %378 = vmatpush1.msra.mxu0 %v261
        %379 = vmatprep.subr.mxu0 0.0
        %380 = vmatpush1.msra.mxu0 %v369
        %381 = vmatprep.subr.mxu0 0.0
        %382 = vmatpush1.msra.mxu0 0.0
        %383 = vmatprep.subr.mxu0 0.0
        %384 = vmatpush1.msra.mxu0 0.0
        %385 = vmatprep.subr.mxu0 0.0
        %386 = vmatpush1.msra.mxu0 0.0
        %387 = vmatprep.subr.mxu0 0.0
        %388 = vmatpush1.msra.mxu0 0.0
        %389 = vmatprep.subr.mxu0 0.0
        %390 = vmatpush1.msra.mxu0 0.0
        %391 = vmatprep.subr.mxu0 0.0
        %392 = vmatpush1.msra.mxu0 0.0
        %393 = vmatprep.subr.mxu0 0.0
        %394 = vmatpush1.msra.mxu0 0.0
        %395 = vmatprep.subr.mxu0 0.0
        %396 = vmatpush1.msra.mxu0 0.0
        %397 = vmatprep.subr.mxu0 0.0
        %398 = vmatpush1.msra.mxu0 0.0
        %399 = vmatprep.subr.mxu0 0.0
        %400 = vmatpush1.msra.mxu0 0.0
        %401 = vmatprep.subr.mxu0 0.0
        %402 = vmatpush1.msra.mxu0 0.0
        %403 = vmatprep.subr.mxu0 0.0
        %404 = vmatpush1.msra.mxu0 0.0
        %405 = vmatprep.subr.mxu0 0.0
        %406 = vmatpush1.msra.mxu0 0.0
        %407 = vmatprep.subr.mxu0 0.0
        %408 = vmatpush1.msra.mxu0 0.0
        %409 = vmatprep.subr.mxu0 0.0
        %410 = vmatpush1.msra.mxu0 0.0
        %411 = vmatprep.subr.mxu0 0.0
        %412 = vmatpush1.msra.mxu0 0.0
        %413 = vmatprep.subr.mxu0 0.0
        %414 = vmatpush1.msra.mxu0 0.0
        %415 = vmatprep.subr.mxu0 0.0
        %416 = vmatpush1.msra.mxu0 0.0
        %417 = vmatprep.subr.mxu0 0.0
        %418 = vmatpush1.msra.mxu0 0.0
        %419 = vmatprep.subr.mxu0 0.0
        %420 = vmatpush1.msra.mxu0 0.0
        %421 = vmatprep.subr.mxu0 0.0
        %422 = vmatpush1.msra.mxu0 0.0
        %423 = vmatprep.subr.mxu0 0.0
        %424 = vmatpush1.msra.mxu0 0.0
        %425 = vmatprep.subr.mxu0 0.0
        %426 = vmatpush1.msra.mxu0 0.0
        %427 = vmatprep.subr.mxu0 0.0
        %428 = vmatpush1.msra.mxu0 0.0
        %429 = vmatprep.subr.mxu0 0.0
        %430 = vmatpush1.msra.mxu0 0.0
        %431 = vmatprep.subr.mxu0 0.0
        %432 = vmatpush1.msra.mxu0 0.0
        %433 = vmatprep.subr.mxu0 0.0
        %434 = vmatpush1.msra.mxu0 0.0
        %435 = vmatprep.mubr.f32.mxu0 0.0
        %436 = vmatmul.mubr.f32.gmra.mrb[0].mxu0 %v272
        %v437 = vpop.f32.mrb[0].mxu0
        %v438 = vadd.f32 %v268, %v437
        %v439 = vpop.f32.mrb[0].mxu0
        %440 = vmatprep.mubr.f32.mxu0 0.0
        %441 = vmatmul.mubr.f32.gmra.mrb[0].mxu0 %v275
        %v442 = vpop.f32.mrb[0].mxu0
        %v443 = vadd.f32 %v268, %v442
        %v444 = vpop.f32.mrb[0].mxu0
        %445 = vmatprep.mubr.f32.mxu0 0.0
        %446 = vmatmul.mubr.f32.gmra.mrb[0].mxu0 %v278
        %v447 = vpop.f32.mrb[0].mxu0
        %v448 = vadd.f32 %v268, %v447
        %v449 = vpop.f32.mrb[0].mxu0
        %450 = vmatprep.mubr.f32.mxu0 0.0
        %451 = vmatmul.mubr.f32.gmra.mrb[0].mxu0 %v281
        %v452 = vpop.f32.mrb[0].mxu0
        %v453 = vadd.f32 %v268, %v452
        %v454 = vpop.f32.mrb[0].mxu0
        %455 = vmatprep.mubr.f32.mxu0 0.0
        %456 = vmatmul.mubr.f32.gmra.mrb[0].mxu0 %v284
        %v457 = vpop.f32.mrb[0].mxu0
        %v458 = vadd.f32 %v268, %v457
        %v459 = vpop.f32.mrb[0].mxu0
        %460 = vmatprep.mubr.f32.mxu0 0.0
        %461 = vmatmul.mubr.f32.gmra.mrb[0].mxu0 %v287
        %v462 = vpop.f32.mrb[0].mxu0
        %v463 = vadd.f32 %v268, %v462
        %v464 = vpop.f32.mrb[0].mxu0
        %465 = vmatprep.mubr.f32.mxu0 0.0
        %466 = vmatmul.mubr.f32.gmra.mrb[0].mxu0 %v290
        %v467 = vpop.f32.mrb[0].mxu0
        %v468 = vadd.f32 %v268, %v467
        %v469 = vpop.f32.mrb[0].mxu0
        %470 = vmatprep.mubr.f32.mxu0 0.0
        %471 = vmatmul.mubr.f32.gmra.mrb[0].mxu0 %v293
        %v472 = vpop.f32.mrb[0].mxu0
        %v473 = vadd.f32 %v268, %v472
        %v474 = vpop.f32.mrb[0].mxu0
        %475 = vmatprep.mubr.f32.mxu0 0.0
        %476 = vmatmul.mubr.f32.gmra.mrb[0].mxu0 %v296
        %v477 = vpop.f32.mrb[0].mxu0
        %v478 = vadd.f32 %v268, %v477
        %v479 = vpop.f32.mrb[0].mxu0
        %480 = vmatprep.mubr.f32.mxu0 0.0
        %481 = vmatmul.mubr.f32.gmra.mrb[0].mxu0 %v299
        %v482 = vpop.f32.mrb[0].mxu0
        %v483 = vadd.f32 %v268, %v482
        %v484 = vpop.f32.mrb[0].mxu0
        %485 = vmatprep.mubr.f32.mxu0 0.0
        %486 = vmatmul.mubr.f32.gmra.mrb[0].mxu0 %v302
        %v487 = vpop.f32.mrb[0].mxu0
        %v488 = vadd.f32 %v268, %v487
        %v489 = vpop.f32.mrb[0].mxu0
        %490 = vmatprep.mubr.f32.mxu0 0.0
        %491 = vmatmul.mubr.f32.gmra.mrb[0].mxu0 %v305
        %v492 = vpop.f32.mrb[0].mxu0
        %v493 = vadd.f32 %v268, %v492
        %v494 = vpop.f32.mrb[0].mxu0
        %495 = vmatprep.mubr.f32.mxu0 0.0
        %496 = vmatmul.mubr.f32.gmra.mrb[0].mxu0 %v308
        %v497 = vpop.f32.mrb[0].mxu0
        %v498 = vadd.f32 %v268, %v497
        %v499 = vpop.f32.mrb[0].mxu0
        %500 = vmatprep.mubr.f32.mxu0 0.0
        %501 = vmatmul.mubr.f32.gmra.mrb[0].mxu0 %v311
        %v502 = vpop.f32.mrb[0].mxu0
        %v503 = vadd.f32 %v268, %v502
        %v504 = vpop.f32.mrb[0].mxu0
        %505 = vmatprep.mubr.f32.mxu0 0.0
        %506 = vmatmul.mubr.f32.gmra.mrb[0].mxu0 %v314
        %v507 = vpop.f32.mrb[0].mxu0
        %v508 = vadd.f32 %v268, %v507
        %v509 = vpop.f32.mrb[0].mxu0
        %510 = vmatprep.mubr.f32.mxu0 0.0
        %511 = vmatmul.mubr.f32.gmra.mrb[0].mxu0 %v317
        %v512 = vpop.f32.mrb[0].mxu0
        %v513 = vadd.f32 %v268, %v512
        %v514 = vpop.f32.mrb[0].mxu0
        %515 = vmatprep.mubr.f32.mxu0 0.0
        %516 = vmatmul.mubr.f32.gmra.mrb[0].mxu0 %v320
        %v517 = vpop.f32.mrb[0].mxu0
        %v518 = vadd.f32 %v268, %v517
        %v519 = vpop.f32.mrb[0].mxu0
        %520 = vmatprep.mubr.f32.mxu0 0.0
        %521 = vmatmul.mubr.f32.gmra.mrb[0].mxu0 %v323
        %v522 = vpop.f32.mrb[0].mxu0
        %v523 = vadd.f32 %v268, %v522
        %v524 = vpop.f32.mrb[0].mxu0
        %525 = vmatprep.mubr.f32.mxu0 0.0
        %526 = vmatmul.mubr.f32.gmra.mrb[0].mxu0 %v326
        %v527 = vpop.f32.mrb[0].mxu0
        %v528 = vadd.f32 %v268, %v527
        %v529 = vpop.f32.mrb[0].mxu0
        %530 = vmatprep.mubr.f32.mxu0 0.0
        %531 = vmatmul.mubr.f32.gmra.mrb[0].mxu0 %v329
        %v532 = vpop.f32.mrb[0].mxu0
        %v533 = vadd.f32 %v268, %v532
        %v534 = vpop.f32.mrb[0].mxu0
        %535 = vmatprep.mubr.f32.mxu0 0.0
        %536 = vmatmul.mubr.f32.gmra.mrb[0].mxu0 %v332
        %v537 = vpop.f32.mrb[0].mxu0
        %v538 = vadd.f32 %v268, %v537
        %v539 = vpop.f32.mrb[0].mxu0
        %540 = vmatprep.mubr.f32.mxu0 0.0
        %541 = vmatmul.mubr.f32.gmra.mrb[0].mxu0 %v335
        %v542 = vpop.f32.mrb[0].mxu0
        %v543 = vadd.f32 %v268, %v542
        %v544 = vpop.f32.mrb[0].mxu0
        %545 = vmatprep.mubr.f32.mxu0 0.0
        %546 = vmatmul.mubr.f32.gmra.mrb[0].mxu0 %v338
        %v547 = vpop.f32.mrb[0].mxu0
        %v548 = vadd.f32 %v268, %v547
        %v549 = vpop.f32.mrb[0].mxu0
        %550 = vmatprep.mubr.f32.mxu0 0.0
        %551 = vmatmul.mubr.f32.gmra.mrb[0].mxu0 %v341
        %v552 = vpop.f32.mrb[0].mxu0
        %v553 = vadd.f32 %v268, %v552
        %v554 = vpop.f32.mrb[0].mxu0
        %555 = vmatprep.mubr.f32.mxu0 0.0
        %556 = vmatmul.mubr.f32.gmra.mrb[0].mxu0 %v344
        %v557 = vpop.f32.mrb[0].mxu0
        %v558 = vadd.f32 %v268, %v557
        %v559 = vpop.f32.mrb[0].mxu0
        %560 = vmatprep.mubr.f32.mxu0 0.0
        %561 = vmatmul.mubr.f32.gmra.mrb[0].mxu0 %v347
        %v562 = vpop.f32.mrb[0].mxu0
        %v563 = vadd.f32 %v268, %v562
        %v564 = vpop.f32.mrb[0].mxu0
        %565 = vmatprep.mubr.f32.mxu0 0.0
        %566 = vmatmul.mubr.f32.gmra.mrb[0].mxu0 %v350
        %v567 = vpop.f32.mrb[0].mxu0
        %v568 = vadd.f32 %v268, %v567
        %v569 = vpop.f32.mrb[0].mxu0
        %570 = vmatprep.mubr.f32.mxu0 0.0
        %571 = vmatmul.mubr.f32.gmra.mrb[0].mxu0 %v353
        %v572 = vpop.f32.mrb[0].mxu0
        %v573 = vadd.f32 %v268, %v572
        %v574 = vpop.f32.mrb[0].mxu0
        %575 = vmatprep.mubr.f32.mxu0 0.0
        %576 = vmatmul.mubr.f32.gmra.mrb[0].mxu0 %v356
        %v577 = vpop.f32.mrb[0].mxu0
        %v578 = vadd.f32 %v268, %v577
        %v579 = vpop.f32.mrb[0].mxu0
        %580 = vmatprep.mubr.f32.mxu0 0.0
        %581 = vmatmul.mubr.f32.gmra.mrb[0].mxu0 %v359
        %v582 = vpop.f32.mrb[0].mxu0
        %v583 = vadd.f32 %v268, %v582
        %v584 = vpop.f32.mrb[0].mxu0
        %585 = vmatprep.mubr.f32.mxu0 0.0
        %586 = vmatmul.mubr.f32.gmra.mrb[0].mxu0 %v362
        %v587 = vpop.f32.mrb[0].mxu0
        %v588 = vadd.f32 %v268, %v587
        %v589 = vpop.f32.mrb[0].mxu0
        %590 = vmatprep.mubr.f32.mxu0 0.0
        %591 = vmatmul.mubr.f32.gmra.mrb[0].mxu0 %v365
        %v592 = vpop.f32.mrb[0].mxu0
        %v593 = vadd.f32 %v268, %v592
        %v594 = vpop.f32.mrb[0].mxu0
        %595 = vdwg.mxu0
        %v596 = vmax.f32 %v438, 0.0
        %v597 = vmax.f32 %v443, 0.0
        %v598 = vmax.f32 %v448, 0.0
        %v599 = vmax.f32 %v453, 0.0
        %v600 = vmax.f32 %v458, 0.0
        %v601 = vmax.f32 %v463, 0.0
        %v602 = vmax.f32 %v468, 0.0
        %v603 = vmax.f32 %v473, 0.0
        %v604 = vmax.f32 %v478, 0.0
        %v605 = vmax.f32 %v483, 0.0
        %v606 = vmax.f32 %v488, 0.0
        %v607 = vmax.f32 %v493, 0.0
        %v608 = vmax.f32 %v498, 0.0
        %v609 = vmax.f32 %v503, 0.0
        %v610 = vmax.f32 %v508, 0.0
        %v611 = vmax.f32 %v513, 0.0
        %v612 = vmax.f32 %v518, 0.0
        %v613 = vmax.f32 %v523, 0.0
        %v614 = vmax.f32 %v528, 0.0
        %v615 = vmax.f32 %v533, 0.0
        %v616 = vmax.f32 %v538, 0.0
        %v617 = vmax.f32 %v543, 0.0
        %v618 = vmax.f32 %v548, 0.0
        %v619 = vmax.f32 %v553, 0.0
        %v620 = vmax.f32 %v558, 0.0
        %v621 = vmax.f32 %v563, 0.0
        %v622 = vmax.f32 %v568, 0.0
        %v623 = vmax.f32 %v573, 0.0
        %v624 = vmax.f32 %v578, 0.0
        %v625 = vmax.f32 %v583, 0.0
        %v626 = vmax.f32 %v588, 0.0
        %v627 = vmax.f32 %v593, 0.0
        %v628 = vld [vmem:[%s3] sm:$0xff]
        %v629 = vld [vmem:[%s3 + $0x8] sm:$0xff]
        %v630 = vld [vmem:[%s3 + $0x10] sm:$0xff]
        %v631 = vld [vmem:[%s3 + $0x18] sm:$0xff]
        %v632 = vld [vmem:[%s3 + $0x20] sm:$0xff]
        %v633 = vld [vmem:[%s3 + $0x28] sm:$0xff]
        %v634 = vld [vmem:[%s3 + $0x30] sm:$0xff]
        %v635 = vld [vmem:[%s3 + $0x38] sm:$0xff]
        %v636 = vld [vmem:[%s3 + $0x40] sm:$0xff]
        %v637 = vld [vmem:[%s3 + $0x48] sm:$0xff]
        %v638 = vld [vmem:[%s3 + $0x50] sm:$0xff]
        %v639 = vld [vmem:[%s3 + $0x58] sm:$0xff]
        %v640 = vld [vmem:[%s3 + $0x60] sm:$0xff]
        %v641 = vld [vmem:[%s3 + $0x68] sm:$0xff]
        %v642 = vld [vmem:[%s3 + $0x70] sm:$0xff]
        %v643 = vld [vmem:[%s3 + $0x78] sm:$0xff]
        %v644 = vld [vmem:[%s4] sm:$0x1]
        %v646 = vlaneseq
        %v647 = vshrl.u32 %v646, 7
        %v648 = vsub.s32 0, %v647
        %v649 = vrot.slane %v644, %v648
        %651 = vmatprep.subr.mxu0 0.0
        %652 = vmatpush1.msra.mxu0 %v628
        %653 = vmatprep.subr.mxu0 0.0
        %654 = vmatpush1.msra.mxu0 %v629
        %655 = vmatprep.subr.mxu0 0.0
        %656 = vmatpush1.msra.mxu0 %v630
        %657 = vmatprep.subr.mxu0 0.0
        %658 = vmatpush1.msra.mxu0 %v631
        %659 = vmatprep.subr.mxu0 0.0
        %660 = vmatpush1.msra.mxu0 %v632
        %661 = vmatprep.subr.mxu0 0.0
        %662 = vmatpush1.msra.mxu0 %v633
        %663 = vmatprep.subr.mxu0 0.0
        %664 = vmatpush1.msra.mxu0 %v634
        %665 = vmatprep.subr.mxu0 0.0
        %666 = vmatpush1.msra.mxu0 %v635
        %667 = vmatprep.subr.mxu0 0.0
        %668 = vmatpush1.msra.mxu0 %v636
        %669 = vmatprep.subr.mxu0 0.0
        %670 = vmatpush1.msra.mxu0 %v637
        %671 = vmatprep.subr.mxu0 0.0
        %672 = vmatpush1.msra.mxu0 %v638
        %673 = vmatprep.subr.mxu0 0.0
        %674 = vmatpush1.msra.mxu0 %v639
        %675 = vmatprep.subr.mxu0 0.0
        %676 = vmatpush1.msra.mxu0 %v640
        %677 = vmatprep.subr.mxu0 0.0
        %678 = vmatpush1.msra.mxu0 %v641
        %679 = vmatprep.subr.mxu0 0.0
        %680 = vmatpush1.msra.mxu0 %v642
        %681 = vmatprep.subr.mxu0 0.0
        %682 = vmatpush1.msra.mxu0 %v643
        %683 = vmatprep.subr.mxu0 0.0
        %684 = vmatpush1.msra.mxu0 0.0
        %685 = vmatprep.subr.mxu0 0.0
        %686 = vmatpush1.msra.mxu0 0.0
        %687 = vmatprep.subr.mxu0 0.0
        %688 = vmatpush1.msra.mxu0 0.0
        %689 = vmatprep.subr.mxu0 0.0
        %690 = vmatpush1.msra.mxu0 0.0
        %691 = vmatprep.subr.mxu0 0.0
        %692 = vmatpush1.msra.mxu0 0.0
        %693 = vmatprep.subr.mxu0 0.0
        %694 = vmatpush1.msra.mxu0 0.0
        %695 = vmatprep.subr.mxu0 0.0
        %696 = vmatpush1.msra.mxu0 0.0
        %697 = vmatprep.subr.mxu0 0.0
        %698 = vmatpush1.msra.mxu0 0.0
        %699 = vmatprep.subr.mxu0 0.0
        %700 = vmatpush1.msra.mxu0 0.0
        %701 = vmatprep.subr.mxu0 0.0
        %702 = vmatpush1.msra.mxu0 0.0
        %703 = vmatprep.subr.mxu0 0.0
        %704 = vmatpush1.msra.mxu0 0.0
        %705 = vmatprep.subr.mxu0 0.0
        %706 = vmatpush1.msra.mxu0 0.0
        %707 = vmatprep.subr.mxu0 0.0
        %708 = vmatpush1.msra.mxu0 0.0
        %709 = vmatprep.subr.mxu0 0.0
        %710 = vmatpush1.msra.mxu0 0.0
        %711 = vmatprep.subr.mxu0 0.0
        %712 = vmatpush1.msra.mxu0 0.0
        %713 = vmatprep.subr.mxu0 0.0
        %714 = vmatpush1.msra.mxu0 0.0
        %715 = vmatprep.mubr.f32.mxu0 0.0
        %716 = vmatmul.mubr.f32.gmra.mrb[0].mxu0 %v596
        %v717 = vpop.f32.mrb[0].mxu0
        %v718 = vadd.f32 %v649, %v717
        %v719 = vpop.f32.mrb[0].mxu0
        %720 = vmatprep.mubr.f32.mxu0 0.0
        %721 = vmatmul.mubr.f32.gmra.mrb[0].mxu0 %v597
        %v722 = vpop.f32.mrb[0].mxu0
        %v723 = vadd.f32 %v649, %v722
        %v724 = vpop.f32.mrb[0].mxu0
        %725 = vmatprep.mubr.f32.mxu0 0.0
        %726 = vmatmul.mubr.f32.gmra.mrb[0].mxu0 %v598
        %v727 = vpop.f32.mrb[0].mxu0
        %v728 = vadd.f32 %v649, %v727
        %v729 = vpop.f32.mrb[0].mxu0
        %730 = vmatprep.mubr.f32.mxu0 0.0
        %731 = vmatmul.mubr.f32.gmra.mrb[0].mxu0 %v599
        %v732 = vpop.f32.mrb[0].mxu0
        %v733 = vadd.f32 %v649, %v732
        %v734 = vpop.f32.mrb[0].mxu0
        %735 = vmatprep.mubr.f32.mxu0 0.0
        %736 = vmatmul.mubr.f32.gmra.mrb[0].mxu0 %v600
        %v737 = vpop.f32.mrb[0].mxu0
        %v738 = vadd.f32 %v649, %v737
        %v739 = vpop.f32.mrb[0].mxu0
        %740 = vmatprep.mubr.f32.mxu0 0.0
        %741 = vmatmul.mubr.f32.gmra.mrb[0].mxu0 %v601
        %v742 = vpop.f32.mrb[0].mxu0
        %v743 = vadd.f32 %v649, %v742
        %v744 = vpop.f32.mrb[0].mxu0
        %745 = vmatprep.mubr.f32.mxu0 0.0
        %746 = vmatmul.mubr.f32.gmra.mrb[0].mxu0 %v602
        %v747 = vpop.f32.mrb[0].mxu0
        %v748 = vadd.f32 %v649, %v747
        %v749 = vpop.f32.mrb[0].mxu0
        %750 = vmatprep.mubr.f32.mxu0 0.0
        %751 = vmatmul.mubr.f32.gmra.mrb[0].mxu0 %v603
        %v752 = vpop.f32.mrb[0].mxu0
        %v753 = vadd.f32 %v649, %v752
        %v754 = vpop.f32.mrb[0].mxu0
        %755 = vmatprep.mubr.f32.mxu0 0.0
        %756 = vmatmul.mubr.f32.gmra.mrb[0].mxu0 %v604
        %v757 = vpop.f32.mrb[0].mxu0
        %v758 = vadd.f32 %v649, %v757
        %v759 = vpop.f32.mrb[0].mxu0
        %760 = vmatprep.mubr.f32.mxu0 0.0
        %761 = vmatmul.mubr.f32.gmra.mrb[0].mxu0 %v605
        %v762 = vpop.f32.mrb[0].mxu0
        %v763 = vadd.f32 %v649, %v762
        %v764 = vpop.f32.mrb[0].mxu0
        %765 = vmatprep.mubr.f32.mxu0 0.0
        %766 = vmatmul.mubr.f32.gmra.mrb[0].mxu0 %v606
        %v767 = vpop.f32.mrb[0].mxu0
        %v768 = vadd.f32 %v649, %v767
        %v769 = vpop.f32.mrb[0].mxu0
        %770 = vmatprep.mubr.f32.mxu0 0.0
        %771 = vmatmul.mubr.f32.gmra.mrb[0].mxu0 %v607
        %v772 = vpop.f32.mrb[0].mxu0
        %v773 = vadd.f32 %v649, %v772
        %v774 = vpop.f32.mrb[0].mxu0
        %775 = vmatprep.mubr.f32.mxu0 0.0
        %776 = vmatmul.mubr.f32.gmra.mrb[0].mxu0 %v608
        %v777 = vpop.f32.mrb[0].mxu0
        %v778 = vadd.f32 %v649, %v777
        %v779 = vpop.f32.mrb[0].mxu0
        %780 = vmatprep.mubr.f32.mxu0 0.0
        %781 = vmatmul.mubr.f32.gmra.mrb[0].mxu0 %v609
        %v782 = vpop.f32.mrb[0].mxu0
        %v783 = vadd.f32 %v649, %v782
        %v784 = vpop.f32.mrb[0].mxu0
        %785 = vmatprep.mubr.f32.mxu0 0.0
        %786 = vmatmul.mubr.f32.gmra.mrb[0].mxu0 %v610
        %v787 = vpop.f32.mrb[0].mxu0
        %v788 = vadd.f32 %v649, %v787
        %v789 = vpop.f32.mrb[0].mxu0
        %790 = vmatprep.mubr.f32.mxu0 0.0
        %791 = vmatmul.mubr.f32.gmra.mrb[0].mxu0 %v611
        %v792 = vpop.f32.mrb[0].mxu0
        %v793 = vadd.f32 %v649, %v792
        %v794 = vpop.f32.mrb[0].mxu0
        %795 = vmatprep.mubr.f32.mxu0 0.0
        %796 = vmatmul.mubr.f32.gmra.mrb[0].mxu0 %v612
        %v797 = vpop.f32.mrb[0].mxu0
        %v798 = vadd.f32 %v649, %v797
        %v799 = vpop.f32.mrb[0].mxu0
        %800 = vmatprep.mubr.f32.mxu0 0.0
        %801 = vmatmul.mubr.f32.gmra.mrb[0].mxu0 %v613
        %v802 = vpop.f32.mrb[0].mxu0
        %v803 = vadd.f32 %v649, %v802
        %v804 = vpop.f32.mrb[0].mxu0
        %805 = vmatprep.mubr.f32.mxu0 0.0
        %806 = vmatmul.mubr.f32.gmra.mrb[0].mxu0 %v614
        %v807 = vpop.f32.mrb[0].mxu0
        %v808 = vadd.f32 %v649, %v807
        %v809 = vpop.f32.mrb[0].mxu0
        %810 = vmatprep.mubr.f32.mxu0 0.0
        %811 = vmatmul.mubr.f32.gmra.mrb[0].mxu0 %v615
        %v812 = vpop.f32.mrb[0].mxu0
        %v813 = vadd.f32 %v649, %v812
        %v814 = vpop.f32.mrb[0].mxu0
        %815 = vmatprep.mubr.f32.mxu0 0.0
        %816 = vmatmul.mubr.f32.gmra.mrb[0].mxu0 %v616
        %v817 = vpop.f32.mrb[0].mxu0
        %v818 = vadd.f32 %v649, %v817
        %v819 = vpop.f32.mrb[0].mxu0
        %820 = vmatprep.mubr.f32.mxu0 0.0
        %821 = vmatmul.mubr.f32.gmra.mrb[0].mxu0 %v617
        %v822 = vpop.f32.mrb[0].mxu0
        %v823 = vadd.f32 %v649, %v822
        %v824 = vpop.f32.mrb[0].mxu0
        %825 = vmatprep.mubr.f32.mxu0 0.0
        %826 = vmatmul.mubr.f32.gmra.mrb[0].mxu0 %v618
        %v827 = vpop.f32.mrb[0].mxu0
        %v828 = vadd.f32 %v649, %v827
        %v829 = vpop.f32.mrb[0].mxu0
        %830 = vmatprep.mubr.f32.mxu0 0.0
        %831 = vmatmul.mubr.f32.gmra.mrb[0].mxu0 %v619
        %v832 = vpop.f32.mrb[0].mxu0
        %v833 = vadd.f32 %v649, %v832
        %v834 = vpop.f32.mrb[0].mxu0
        %835 = vmatprep.mubr.f32.mxu0 0.0
        %836 = vmatmul.mubr.f32.gmra.mrb[0].mxu0 %v620
        %v837 = vpop.f32.mrb[0].mxu0
        %v838 = vadd.f32 %v649, %v837
        %v839 = vpop.f32.mrb[0].mxu0
        %840 = vmatprep.mubr.f32.mxu0 0.0
        %841 = vmatmul.mubr.f32.gmra.mrb[0].mxu0 %v621
        %v842 = vpop.f32.mrb[0].mxu0
        %v843 = vadd.f32 %v649, %v842
        %v844 = vpop.f32.mrb[0].mxu0
        %845 = vmatprep.mubr.f32.mxu0 0.0
        %846 = vmatmul.mubr.f32.gmra.mrb[0].mxu0 %v622
        %v847 = vpop.f32.mrb[0].mxu0
        %v848 = vadd.f32 %v649, %v847
        %v849 = vpop.f32.mrb[0].mxu0
        %850 = vmatprep.mubr.f32.mxu0 0.0
        %851 = vmatmul.mubr.f32.gmra.mrb[0].mxu0 %v623
        %v852 = vpop.f32.mrb[0].mxu0
        %v853 = vadd.f32 %v649, %v852
        %v854 = vpop.f32.mrb[0].mxu0
        %855 = vmatprep.mubr.f32.mxu0 0.0
        %856 = vmatmul.mubr.f32.gmra.mrb[0].mxu0 %v624
        %v857 = vpop.f32.mrb[0].mxu0
        %v858 = vadd.f32 %v649, %v857
        %v859 = vpop.f32.mrb[0].mxu0
        %860 = vmatprep.mubr.f32.mxu0 0.0
        %861 = vmatmul.mubr.f32.gmra.mrb[0].mxu0 %v625
        %v862 = vpop.f32.mrb[0].mxu0
        %v863 = vadd.f32 %v649, %v862
        %v864 = vpop.f32.mrb[0].mxu0
        %865 = vmatprep.mubr.f32.mxu0 0.0
        %866 = vmatmul.mubr.f32.gmra.mrb[0].mxu0 %v626
        %v867 = vpop.f32.mrb[0].mxu0
        %v868 = vadd.f32 %v649, %v867
        %v869 = vpop.f32.mrb[0].mxu0
        %870 = vmatprep.mubr.f32.mxu0 0.0
        %871 = vmatmul.mubr.f32.gmra.mrb[0].mxu0 %v627
        %v872 = vpop.f32.mrb[0].mxu0
        %v873 = vadd.f32 %v649, %v872
        %v874 = vpop.f32.mrb[0].mxu0
        %875 = vdwg.mxu0
        %876 = vst [vmem:[%s218] sm:$0xff] %v718
        %877 = vst [vmem:[%s218 + $0x8] sm:$0xff] %v723
        %878 = vst [vmem:[%s218 + $0x10] sm:$0xff] %v728
        %879 = vst [vmem:[%s218 + $0x18] sm:$0xff] %v733
        %880 = vst [vmem:[%s218 + $0x20] sm:$0xff] %v738
        %881 = vst [vmem:[%s218 + $0x28] sm:$0xff] %v743
        %882 = vst [vmem:[%s218 + $0x30] sm:$0xff] %v748
        %883 = vst [vmem:[%s218 + $0x38] sm:$0xff] %v753
        %884 = vst [vmem:[%s218 + $0x40] sm:$0xff] %v758
        %885 = vst [vmem:[%s218 + $0x48] sm:$0xff] %v763
        %886 = vst [vmem:[%s218 + $0x50] sm:$0xff] %v768
        %887 = vst [vmem:[%s218 + $0x58] sm:$0xff] %v773
        %888 = vst [vmem:[%s218 + $0x60] sm:$0xff] %v778
        %889 = vst [vmem:[%s218 + $0x68] sm:$0xff] %v783
        %890 = vst [vmem:[%s218 + $0x70] sm:$0xff] %v788
        %891 = vst [vmem:[%s218 + $0x78] sm:$0xff] %v793
        %892 = vst [vmem:[%s218 + $0x80] sm:$0xff] %v798
        %893 = vst [vmem:[%s218 + $0x88] sm:$0xff] %v803
        %894 = vst [vmem:[%s218 + $0x90] sm:$0xff] %v808
        %895 = vst [vmem:[%s218 + $0x98] sm:$0xff] %v813
        %896 = vst [vmem:[%s218 + $0xa0] sm:$0xff] %v818
        %897 = vst [vmem:[%s218 + $0xa8] sm:$0xff] %v823
        %898 = vst [vmem:[%s218 + $0xb0] sm:$0xff] %v828
        %899 = vst [vmem:[%s218 + $0xb8] sm:$0xff] %v833
        %900 = vst [vmem:[%s218 + $0xc0] sm:$0xff] %v838
        %901 = vst [vmem:[%s218 + $0xc8] sm:$0xff] %v843
        %902 = vst [vmem:[%s218 + $0xd0] sm:$0xff] %v848
        %903 = vst [vmem:[%s218 + $0xd8] sm:$0xff] %v853
        %904 = vst [vmem:[%s218 + $0xe0] sm:$0xff] %v858
        %905 = vst [vmem:[%s218 + $0xe8] sm:$0xff] %v863
        %906 = vst [vmem:[%s218 + $0xf0] sm:$0xff] %v868
        %907 = vst [vmem:[%s218 + $0xf8] sm:$0xff] %v873
        %s908 = sand.u32 %s137, 1
        %s909 = scalar_lea.sflag [#allocation3], %s908
        %s910 = sand.u32 %s137, 1
        %s911 = smul.addr %s910, 256
        %s912 = scalar_lea.vmem [#allocation2], %s911
        // Predicated region
        $region41: #{tpu_custom_call.1} parent=39 // pred_check
          %p913 = pneg %p147
        $region42: #{tpu_custom_call.1} parent=39 // pred_check_branch
          %915 = sbr.rel (%p913) target = $region44
        $region43: #{tpu_custom_call.1} parent=39 // pred_region
          %s916 = smul.u32 32, %s19
          %s918 = ssub.s32 4096, 4096
          %919 = vsyncadd %s909, %s918
          %s920 = smul.addr %s916, 128
          %s921 = scalar_lea.hbm %s5, %s920
          %s922 = sshll.u32 %s912, 4
          %s923 = int_to_ptr.vmem [resolvable:$true] %s922
          %928 = dma.vmem_to_hbm [thread:$0]  %s923, 4096, %s921, %s909, 128, 128, 8
        $region44: #{tpu_custom_call.1} parent=39 // pred_fallthru
          _
      $region40: #{tpu_custom_call.1} parent=5 // pred_fallthru
        _
      %p929 = scmp.le.s32.totalorder 2, %s14
      // Predicated region
      $region45: #{tpu_custom_call.1} parent=5 // pred_check
        %p930 = pneg %p929
      $region46: #{tpu_custom_call.1} parent=5 // pred_check_branch
        %932 = sbr.rel (%p930) target = $region48
      $region47: #{tpu_custom_call.1} parent=5 // pred_region
        %s933 = ssub.s32 %s14, 2
        // Predicated region
        $region49: #{tpu_custom_call.1} parent=47 // pred_check
          %p934 = pneg %p153
        $region50: #{tpu_custom_call.1} parent=47 // pred_check_branch
          %936 = sbr.rel (%p934) target = $region52
        $region51: #{tpu_custom_call.1} parent=47 // pred_region
          %s937 = sand.u32 %s138, 1
          %s938 = scalar_lea.sflag [#allocation3], %s937
          %s939 = sand.u32 %s138, 1
          %s940 = smul.addr %s939, 256
          %s941 = scalar_lea.vmem [#allocation2], %s940
          %942 = dma.done %s938, 4096
        $region52: #{tpu_custom_call.1} parent=47 // pred_fallthru
          _
      $region48: #{tpu_custom_call.1} parent=5 // pred_fallthru
        _
    $region6: #{tpu_custom_call.1} parent=1 // loop_footer
      %s18 = sadd.s32 1, %s14
    $region7: #{tpu_custom_call.1} parent=1 // loop_footer_branch
      %13 = sbr.rel target = $region3
    $region8: #{tpu_custom_call.1} parent=1 // loop_exit
      _
    %943 = vsyncpa [#allocation3], 1
    %s944 = scalar_lea.sflag [#allocation3], 1
    %945 = vsyncpa %s944, 1

</llo_original>
